<compile_context>
chip_gen: v5e
topology: v5e:2x2
jax: 0.10.0
libtpu: 0.0.40
codegen_flags: <defaults>
</compile_context>

<pallas_src>
import jax
import jax.numpy as jnp
from jax.experimental import pallas as pl
from jax.experimental.pallas import tpu as pltpu


def _mlp_kernel(z_ref, w1_ref, b1_ref, w2_ref, b2_ref, w3_ref, b3_ref, y_ref):
    z = z_ref[...]
    h1 = jnp.dot(z, w1_ref[...], preferred_element_type=jnp.float32) + b1_ref[...]
    h1 = jnp.maximum(h1, 0.0)                      # ReLU (dropout = identity in eval)
    h2 = jnp.dot(h1, w2_ref[...], preferred_element_type=jnp.float32) + b2_ref[...]
    h2 = jnp.maximum(h2, 0.0)                      # ReLU (dropout = identity in eval)
    y = jnp.dot(h2, w3_ref[...], preferred_element_type=jnp.float32) + b3_ref[...]
    y_ref[...] = y.astype(y_ref.dtype)


def _pick_batch_tile(B, batch_tile):
    """Batch tile: big (amortise per-step overhead) but >= 2 blocks when possible (v7x)."""
    def round_up(x, m):
        return ((x + m - 1) // m) * m
    if B <= batch_tile:
        return min(B, round_up(pl.cdiv(B, 2), 8))   # tb == B (exempt) or multiple of 8
    return batch_tile                               # multiple of 8 by construction


def simple_nn_pallas(z, params, *, time_index=0, batch_tile=2048):
    """SimpleNN.forward — returns {'theta': y} with y of shape [batch, n_out, 1].

    `z` may be either the 2-D context [batch, n_context] or the full 3-D context
    matrix [batch, time, n_context]; in the 3-D case the `time_index` slice is fused
    into the kernel's DMA (no separate XLA slice pass)."""
    w1, b1, w2, b2, w3, b3 = params
    B = z.shape[0]
    C = z.shape[-1]
    H = w1.shape[1]
    n_out = w3.shape[1]

    tb = _pick_batch_tile(B, batch_tile)
    grid = (pl.cdiv(B, tb),)

    # Weights/biases: full-array blocks, constant index_map -> stay VMEM-resident.
    const = lambda a: pl.BlockSpec(a.shape, lambda i, _a=a: (0,) * _a.ndim)

    cost = pl.CostEstimate(
        flops=2 * B * (C * H + H * H + H * n_out),
        transcendentals=0,
        bytes_accessed=4 * B * (C + n_out)
        + 4 * int(w1.size + b1.size + w2.size + b2.size + w3.size + b3.size),
    )

    def build(z_in_spec):
        return pl.pallas_call(
            _mlp_kernel,
            out_shape=jax.ShapeDtypeStruct((B, n_out), jnp.float32),
            grid=grid,
            in_specs=[
                z_in_spec,                            # z: tiled over batch
                const(w1), const(b1),
                const(w2), const(b2),
                const(w3), const(b3),
            ],
            # Unpadded output: last block dim == full array dim (legal); 8-wide masked
            # store beats the padded-write + post-kernel-slice traffic it replaces.
            out_specs=pl.BlockSpec((tb, n_out), lambda i: (i, 0)),
            compiler_params=pltpu.CompilerParams(
                dimension_semantics=("parallel",),    # v7x: batch blocks split over 2 TCs
            ),
            cost_estimate=cost,
        )

    if z.ndim == 3:
        t = int(time_index)
        # Fused time-slice: squeezed (size-1) time dim, index_map pins t; DMA gathers
        # only the t-th rows straight from HBM (strided rectangular copy).
        fused_spec = pl.BlockSpec((tb, None, C), lambda i: (i, t, 0))
        try:
            y = build(fused_spec)(z, w1, b1, w2, b2, w3, b3)
        except Exception:
            # Fallback for Pallas versions that reject squeezing a second-minor block
            # dim: materialise the slice in the wrapper (original, always-legal path).
            z2d = z[:, t, :]
            y = build(pl.BlockSpec((tb, C), lambda i: (i, 0)))(z2d, w1, b1, w2, b2, w3, b3)
    else:
        y = build(pl.BlockSpec((tb, C), lambda i: (i, 0)))(z, w1, b1, w2, b2, w3, b3)

    return {"theta": y[:, :, None]}                   # unsqueeze(-1) -> [batch, n_out, 1]


def init_simple_nn_params(key, n_context, hidden_size, n_out):
    """Deterministic init matching the nn.Linear shapes of SimpleNN.
    Weights stored pre-transposed as [in, out]; biases as [1, out]."""
    ks = jax.random.split(key, 6)

    def linear(kw, kb, fan_in, fan_out):
        bound = 1.0 / jnp.sqrt(fan_in)
        w = jax.random.uniform(kw, (fan_in, fan_out), jnp.float32, -bound, bound)
        b = jax.random.uniform(kb, (1, fan_out), jnp.float32, -bound, bound)
        return w, b

    w1, b1 = linear(ks[0], ks[1], n_context, hidden_size)
    w2, b2 = linear(ks[2], ks[3], hidden_size, hidden_size)
    w3, b3 = linear(ks[4], ks[5], hidden_size, n_out)
    return (w1, b1, w2, b2, w3, b3)


def dfl_forward(Z, initial_state, params, *, batch_tile=2048):
    """DFL.forward: one-stage prediction.
    Z: [batch, time, n_context], initial_state: [batch, ...].
    Returns the predicted cost vector theta ([batch, f, 1]); the downstream
    convex-optimisation decisions cannot be produced without the cvxpy problem."""
    theta_1 = simple_nn_pallas(Z, params, time_index=0, batch_tile=batch_tile)["theta"]
    # TODO(synk): decisions = CvxpyLayer(theta_1, initial_state[:, [0], ...]) — no Pallas equivalent.
    del initial_state
    return {"theta": theta_1}


def _mlp_reference(z, params):
    w1, b1, w2, b2, w3, b3 = params
    h = jnp.maximum(z @ w1 + b1, 0.0)
    h = jnp.maximum(h @ w2 + b2, 0.0)
    return (h @ w3 + b3)[..., None]


if __name__ == "__main__":
    hyperparameters = {"n_context": 32, "latent_size": 32, "f": 8}
    B, T = 2, hyperparameters["f"]

    key = jax.random.PRNGKey(0)
    k_params, k_z, k_s, k_big = jax.random.split(key, 4)

    params = init_simple_nn_params(
        k_params,
        n_context=hyperparameters["n_context"],
        hidden_size=hyperparameters["latent_size"],
        n_out=hyperparameters["f"],
    )

    # --- small demo matching the module's forward signature -------------------------
    Z = jax.random.normal(k_z, (B, T, hyperparameters["n_context"]), jnp.float32)
    initial_state = jax.random.normal(k_s, (B, T), jnp.float32)

    out = dfl_forward(Z, initial_state, params)
    theta = jax.block_until_ready(out["theta"])

    ref = _mlp_reference(Z[:, 0, :], params)
    assert theta.shape == (B, hyperparameters["f"], 1)
    assert jnp.allclose(theta, ref, atol=1e-5), "Pallas MLP mismatch vs reference (small batch)"

    # --- larger batch: >= 2 parallel batch blocks and a partial (clamped) last block ----
    B_big = 1000
    Z_big = jax.random.normal(k_big, (B_big, T, hyperparameters["n_context"]), jnp.float32)
    theta_big = jax.block_until_ready(simple_nn_pallas(Z_big, params)["theta"])
    ref_big = _mlp_reference(Z_big[:, 0, :], params)
    assert theta_big.shape == (B_big, hyperparameters["f"], 1)
    assert jnp.allclose(theta_big, ref_big, atol=1e-5), "Pallas MLP mismatch vs reference (tiled batch)"

    print("KERNEL_OK")
</pallas_src>

<mosaic_0001>
module attributes {stable_mosaic.version = 11 : i64} {
  func.func @_mlp_kernel(%arg0: i32, %arg1: memref<2x32xf32, #tpu.memory_space<vmem>>, %arg2: memref<32x32xf32, #tpu.memory_space<vmem>>, %arg3: memref<1x32xf32, #tpu.memory_space<vmem>>, %arg4: memref<32x32xf32, #tpu.memory_space<vmem>>, %arg5: memref<1x32xf32, #tpu.memory_space<vmem>>, %arg6: memref<32x8xf32, #tpu.memory_space<vmem>>, %arg7: memref<1x8xf32, #tpu.memory_space<vmem>>, %arg8: memref<2x8xf32, #tpu.memory_space<vmem>>) attributes {dimension_semantics = [#tpu.dimension_semantics<parallel>], iteration_bounds = array<i64: 1>, scalar_prefetch = 0 : i64, scratch_operands = 0 : i64, tpu.core_type = #tpu.core_type<tc>, window_params = [{transform_indices = @transform_0, window_bounds = array<i64: 2, 32>}, {pipeline_mode = #tpu.pipeline_mode<synchronous>, transform_indices = @transform_1, window_bounds = array<i64: 32, 32>}, {pipeline_mode = #tpu.pipeline_mode<synchronous>, transform_indices = @transform_2, window_bounds = array<i64: 1, 32>}, {pipeline_mode = #tpu.pipeline_mode<synchronous>, transform_indices = @transform_3, window_bounds = array<i64: 32, 32>}, {pipeline_mode = #tpu.pipeline_mode<synchronous>, transform_indices = @transform_4, window_bounds = array<i64: 1, 32>}, {pipeline_mode = #tpu.pipeline_mode<synchronous>, transform_indices = @transform_5, window_bounds = array<i64: 32, 8>}, {pipeline_mode = #tpu.pipeline_mode<synchronous>, transform_indices = @transform_6, window_bounds = array<i64: 1, 8>}, {transform_indices = @transform_7, window_bounds = array<i64: 2, 8>}]} {
    %c0 = arith.constant 0 : index
    %c0_0 = arith.constant 0 : index
    %0 = vector.load %arg1[%c0, %c0_0] : memref<2x32xf32, #tpu.memory_space<vmem>>, vector<2x32xf32>
    %c0_1 = arith.constant 0 : index
    %c0_2 = arith.constant 0 : index
    %1 = vector.load %arg2[%c0_1, %c0_2] : memref<32x32xf32, #tpu.memory_space<vmem>>, vector<32x32xf32>
    %cst = arith.constant dense<0.000000e+00> : vector<2x32xf32>
    %2 = tpu.matmul %0, %1, %cst {dimension_numbers = #tpu.dot_dimension_numbers<[1], [0], [0], [1], [0, 0, 1, 1], [], []>} : vector<2x32xf32>, vector<32x32xf32>, vector<2x32xf32> -> vector<2x32xf32>
    %c0_3 = arith.constant 0 : index
    %c0_4 = arith.constant 0 : index
    %3 = vector.load %arg3[%c0_3, %c0_4] : memref<1x32xf32, #tpu.memory_space<vmem>>, vector<1x32xf32>
    %4 = vector.broadcast %3 : vector<1x32xf32> to vector<2x32xf32>
    %5 = arith.addf %2, %4 : vector<2x32xf32>
    %cst_5 = arith.constant 0.000000e+00 : f32
    %6 = vector.broadcast %cst_5 : f32 to vector<2x32xf32>
    %7 = arith.maximumf %5, %6 : vector<2x32xf32>
    %c0_6 = arith.constant 0 : index
    %c0_7 = arith.constant 0 : index
    %8 = vector.load %arg4[%c0_6, %c0_7] : memref<32x32xf32, #tpu.memory_space<vmem>>, vector<32x32xf32>
    %cst_8 = arith.constant dense<0.000000e+00> : vector<2x32xf32>
    %9 = tpu.matmul %7, %8, %cst_8 {dimension_numbers = #tpu.dot_dimension_numbers<[1], [0], [0], [1], [0, 0, 1, 1], [], []>} : vector<2x32xf32>, vector<32x32xf32>, vector<2x32xf32> -> vector<2x32xf32>
    %c0_9 = arith.constant 0 : index
    %c0_10 = arith.constant 0 : index
    %10 = vector.load %arg5[%c0_9, %c0_10] : memref<1x32xf32, #tpu.memory_space<vmem>>, vector<1x32xf32>
    %11 = vector.broadcast %10 : vector<1x32xf32> to vector<2x32xf32>
    %12 = arith.addf %9, %11 : vector<2x32xf32>
    %cst_11 = arith.constant 0.000000e+00 : f32
    %13 = vector.broadcast %cst_11 : f32 to vector<2x32xf32>
    %14 = arith.maximumf %12, %13 : vector<2x32xf32>
    %c0_12 = arith.constant 0 : index
    %c0_13 = arith.constant 0 : index
    %15 = vector.load %arg6[%c0_12, %c0_13] : memref<32x8xf32, #tpu.memory_space<vmem>>, vector<32x8xf32>
    %cst_14 = arith.constant dense<0.000000e+00> : vector<2x8xf32>
    %16 = tpu.matmul %14, %15, %cst_14 {dimension_numbers = #tpu.dot_dimension_numbers<[1], [0], [0], [1], [0, 0, 1, 1], [], []>} : vector<2x32xf32>, vector<32x8xf32>, vector<2x8xf32> -> vector<2x8xf32>
    %c0_15 = arith.constant 0 : index
    %c0_16 = arith.constant 0 : index
    %17 = vector.load %arg7[%c0_15, %c0_16] : memref<1x8xf32, #tpu.memory_space<vmem>>, vector<1x8xf32>
    %18 = vector.broadcast %17 : vector<1x8xf32> to vector<2x8xf32>
    %19 = arith.addf %16, %18 : vector<2x8xf32>
    %c0_17 = arith.constant 0 : index
    %c0_18 = arith.constant 0 : index
    %20 = vector.load %arg8[%c0_17, %c0_18] : memref<2x8xf32, #tpu.memory_space<vmem>>, vector<2x8xf32>
    tpu.vector_store %arg8[%c0_17, %c0_18], %19 {strides = array<i32>} : memref<2x8xf32, #tpu.memory_space<vmem>>, vector<2x8xf32>,
    return
  }
  func.func @transform_0(%arg0: i32) -> (i32, i32) {
    %c0_i32 = arith.constant 0 : i32
    %c0_i32_0 = arith.constant 0 : i32
    return %arg0, %c0_i32 : i32, i32
  }
  func.func @transform_1(%arg0: i32) -> (i32, i32) {
    %c0_i32 = arith.constant 0 : i32
    %c0_i32_0 = arith.constant 0 : i32
    %c0_i32_1 = arith.constant 0 : i32
    return %c0_i32, %c0_i32_0 : i32, i32
  }
  func.func @transform_2(%arg0: i32) -> (i32, i32) {
    %c0_i32 = arith.constant 0 : i32
    %c0_i32_0 = arith.constant 0 : i32
    %c0_i32_1 = arith.constant 0 : i32
    return %c0_i32, %c0_i32_0 : i32, i32
  }
  func.func @transform_3(%arg0: i32) -> (i32, i32) {
    %c0_i32 = arith.constant 0 : i32
    %c0_i32_0 = arith.constant 0 : i32
    %c0_i32_1 = arith.constant 0 : i32
    return %c0_i32, %c0_i32_0 : i32, i32
  }
  func.func @transform_4(%arg0: i32) -> (i32, i32) {
    %c0_i32 = arith.constant 0 : i32
    %c0_i32_0 = arith.constant 0 : i32
    %c0_i32_1 = arith.constant 0 : i32
    return %c0_i32, %c0_i32_0 : i32, i32
  }
  func.func @transform_5(%arg0: i32) -> (i32, i32) {
    %c0_i32 = arith.constant 0 : i32
    %c0_i32_0 = arith.constant 0 : i32
    %c0_i32_1 = arith.constant 0 : i32
    return %c0_i32, %c0_i32_0 : i32, i32
  }
  func.func @transform_6(%arg0: i32) -> (i32, i32) {
    %c0_i32 = arith.constant 0 : i32
    %c0_i32_0 = arith.constant 0 : i32
    %c0_i32_1 = arith.constant 0 : i32
    return %c0_i32, %c0_i32_0 : i32, i32
  }
  func.func @transform_7(%arg0: i32) -> (i32, i32) {
    %c0_i32 = arith.constant 0 : i32
    %c0_i32_0 = arith.constant 0 : i32
    return %arg0, %c0_i32 : i32, i32
  }
}

</mosaic_0001>

<llo_original>
// kernel: tpu_custom_call.1
$region0: #{tpu_custom_call.1}
  #allocation0 [shape = 'u32[]', space=smem, size = 0x4, offset = 0x4, fixed_abs, tag = 'smem constant byte address 0x4 - core index']
  #allocation1 [shape = 'u32[72,128]{1,0:T(1,128)}', space=vmem, size = 0x9000, scoped, tag = 'internal scratch']
  %s0 = inlined_call_operand.vmem [shape: f32[2,32], index: 0, kind: input, shape index: {}]
  %s1 = inlined_call_operand.vmem [shape: f32[32,32], index: 1, kind: input, shape index: {}]
  %s2 = inlined_call_operand.vmem [shape: f32[1,32], index: 2, kind: input, shape index: {}]
  %s3 = inlined_call_operand.hbm [shape: f32[32,32], index: 3, kind: input, shape index: {}]
  %s4 = inlined_call_operand.vmem [shape: f32[1,32], index: 4, kind: input, shape index: {}]
  %s5 = inlined_call_operand.vmem [shape: f32[32,8], index: 5, kind: input, shape index: {}]
  %s6 = inlined_call_operand.vmem [shape: f32[1,8], index: 6, kind: input, shape index: {}]
  %s7 = inlined_call_operand.hbm [shape: f32[2,8], index: 7, kind: output, shape index: {}]
  %s8 = sld [smem:[#allocation0]]
  $region42: #{tpu_custom_call.1} parent=0
    _
  %s10 = ssub.s32 1, %s8
  %s11 = scalar_select 0, %s10, %s8
  $region1: #{tpu_custom_call.1} parent=0
    #allocation2 [shape = 'u8[16384]{0}', space=vmem, size = 0x4000, scoped, tag = 'input window, operand 3, single buffered']
    #allocation3 [shape = 's32[1]{0}', space=sflag, size = 0x4, scoped, tag = 'scoped memory for tpu_custom_call.1']
    #allocation4 [shape = 's32[1]{0}', space=sflag, size = 0x4, scoped, tag = 'scoped memory for tpu_custom_call.1']
    #allocation5 [shape = 'u8[1024]{0}', space=vmem, size = 0x400, scoped, tag = 'output window, operand 0, single buffered']
    %12 = vsyncpa [#allocation3], 0
    %13 = vsyncpa [#allocation4], 0
    // Predicated region
    $region2: #{tpu_custom_call.1} parent=1 // pred_check
      _
    $region3: #{tpu_custom_call.1} parent=1 // pred_check_branch
      %15 = sbr.rel (0) target = $region5
    $region4: #{tpu_custom_call.1} parent=1 // pred_region
      _
    $region5: #{tpu_custom_call.1} parent=1 // pred_fallthru
      _
    // Predicated region
    $region6: #{tpu_custom_call.1} parent=1 // pred_check
      _
    $region7: #{tpu_custom_call.1} parent=1 // pred_check_branch
      %17 = sbr.rel (0) target = $region9
    $region8: #{tpu_custom_call.1} parent=1 // pred_region
      _
    $region9: #{tpu_custom_call.1} parent=1 // pred_fallthru
      _
    // Predicated region
    $region10: #{tpu_custom_call.1} parent=1 // pred_check
      _
    $region11: #{tpu_custom_call.1} parent=1 // pred_check_branch
      %19 = sbr.rel (0) target = $region13
    $region12: #{tpu_custom_call.1} parent=1 // pred_region
      _
    $region13: #{tpu_custom_call.1} parent=1 // pred_fallthru
      _
    // Predicated region
    $region14: #{tpu_custom_call.1} parent=1 // pred_check
      _
    $region15: #{tpu_custom_call.1} parent=1 // pred_check_branch
      %21 = sbr.rel (0) target = $region17
    $region16: #{tpu_custom_call.1} parent=1 // pred_region
      %23 = vsyncadd [#allocation3], 0
      %s24 = sshll.u32 %s3, 4
      %s25 = int_to_ptr.hbm [resolvable:$true] %s24
      %s26 = sshll.u32 [#allocation2], 4
      %s27 = int_to_ptr.vmem [resolvable:$true] %s26
      %32 = dma.hbm_to_vmem [thread:$0]  %s25, 512, %s27, [#allocation3], 128, 128, 8
    $region17: #{tpu_custom_call.1} parent=1 // pred_fallthru
      _
    // Predicated region
    $region18: #{tpu_custom_call.1} parent=1 // pred_check
      _
    $region19: #{tpu_custom_call.1} parent=1 // pred_check_branch
      %34 = sbr.rel (0) target = $region21
    $region20: #{tpu_custom_call.1} parent=1 // pred_region
      _
    $region21: #{tpu_custom_call.1} parent=1 // pred_fallthru
      _
    // Predicated region
    $region22: #{tpu_custom_call.1} parent=1 // pred_check
      _
    $region23: #{tpu_custom_call.1} parent=1 // pred_check_branch
      %36 = sbr.rel (0) target = $region25
    $region24: #{tpu_custom_call.1} parent=1 // pred_region
      _
    $region25: #{tpu_custom_call.1} parent=1 // pred_fallthru
      _
    // Predicated region
    $region26: #{tpu_custom_call.1} parent=1 // pred_check
      _
    $region27: #{tpu_custom_call.1} parent=1 // pred_check_branch
      %38 = sbr.rel (0) target = $region29
    $region28: #{tpu_custom_call.1} parent=1 // pred_region
      _
    $region29: #{tpu_custom_call.1} parent=1 // pred_fallthru
      _
    // Predicated region
    $region30: #{tpu_custom_call.1} parent=1 // pred_check
      _
    $region31: #{tpu_custom_call.1} parent=1 // pred_check_branch
      %40 = sbr.rel (0) target = $region33
    $region32: #{tpu_custom_call.1} parent=1 // pred_region
      %42 = dma.done [#allocation3], 512
    $region33: #{tpu_custom_call.1} parent=1 // pred_fallthru
      _
    %v43 = vld [vmem:[%s0] sm:$0x3]
    %v44 = vld [vmem:[%s1] sm:$0xff]
    %v45 = vld [vmem:[%s1 + $0x8] sm:$0xff]
    %v46 = vld [vmem:[%s1 + $0x10] sm:$0xff]
    %v47 = vld [vmem:[%s1 + $0x18] sm:$0xff]
    %v48 = vld [vmem:[%s2] sm:$0x1]
    %v50 = vperm.slane %v48, 0
    %vm52 = vcmask 261120
    %v54 = vsel %vm52, %v43, 0
    %56 = vmatpush.msra.mxu0 0.0
    %57 = vmatpush.msra.mxu0 0.0
    %58 = vmatpush.msra.mxu0 0.0
    %59 = vmatpush.msra.mxu0 0.0
    %60 = vmatpush.msra.mxu0 0.0
    %61 = vmatpush.msra.mxu0 0.0
    %62 = vmatpush.msra.mxu0 0.0
    %63 = vmatpush.msra.mxu0 0.0
    %64 = vmatpush.msra.mxu0 0.0
    %65 = vmatpush.msra.mxu0 0.0
    %66 = vmatpush.msra.mxu0 0.0
    %67 = vmatpush.msra.mxu0 0.0
    %68 = vmatpush.msra.mxu0 %v47
    %69 = vmatpush.msra.mxu0 %v46
    %70 = vmatpush.msra.mxu0 %v45
    %71 = vmatpush.msra.mxu0 %v44
    %72 = vmatmul.f32.gmra.mxu0 %v54
    %v73 = vpop.f32.mrf.mxu0
    %v74 = vadd.f32 %v50, %v73
    %75 = vdwg.mxu0
    %v76 = vmax.f32 %v74, 0.0
    %v77 = vld [vmem:[#allocation2] sm:$0xff]
    %v78 = vld [vmem:[#allocation2 + $0x8] sm:$0xff]
    %v79 = vld [vmem:[#allocation2 + $0x10] sm:$0xff]
    %v80 = vld [vmem:[#allocation2 + $0x18] sm:$0xff]
    %v81 = vld [vmem:[%s4] sm:$0x1]
    %v83 = vperm.slane %v81, 0
    %v86 = vsel %vm52, %v76, 0
    %88 = vmatpush.msra.mxu0 0.0
    %89 = vmatpush.msra.mxu0 0.0
    %90 = vmatpush.msra.mxu0 0.0
    %91 = vmatpush.msra.mxu0 0.0
    %92 = vmatpush.msra.mxu0 0.0
    %93 = vmatpush.msra.mxu0 0.0
    %94 = vmatpush.msra.mxu0 0.0
    %95 = vmatpush.msra.mxu0 0.0
    %96 = vmatpush.msra.mxu0 0.0
    %97 = vmatpush.msra.mxu0 0.0
    %98 = vmatpush.msra.mxu0 0.0
    %99 = vmatpush.msra.mxu0 0.0
    %100 = vmatpush.msra.mxu0 %v80
    %101 = vmatpush.msra.mxu0 %v79
    %102 = vmatpush.msra.mxu0 %v78
    %103 = vmatpush.msra.mxu0 %v77
    %104 = vmatmul.f32.gmra.mxu0 %v86
    %v105 = vpop.f32.mrf.mxu0
    %v106 = vadd.f32 %v83, %v105
    %107 = vdwg.mxu0
    %v108 = vmax.f32 %v106, 0.0
    %v109 = vld [vmem:[%s5] sm:$0xff]
    %v110 = vld [vmem:[%s5 + $0x8] sm:$0xff]
    %v111 = vld [vmem:[%s5 + $0x10] sm:$0xff]
    %v112 = vld [vmem:[%s5 + $0x18] sm:$0xff]
    %v113 = vld [vmem:[%s6] sm:$0x1]
    %v115 = vperm.slane %v113, 0
    %v118 = vsel %vm52, %v108, 0
    %120 = vmatpush.msra.mxu0 0.0
    %121 = vmatpush.msra.mxu0 0.0
    %122 = vmatpush.msra.mxu0 0.0
    %123 = vmatpush.msra.mxu0 0.0
    %124 = vmatpush.msra.mxu0 0.0
    %125 = vmatpush.msra.mxu0 0.0
    %126 = vmatpush.msra.mxu0 0.0
    %127 = vmatpush.msra.mxu0 0.0
    %128 = vmatpush.msra.mxu0 0.0
    %129 = vmatpush.msra.mxu0 0.0
    %130 = vmatpush.msra.mxu0 0.0
    %131 = vmatpush.msra.mxu0 0.0
    %132 = vmatpush.msra.mxu0 %v112
    %133 = vmatpush.msra.mxu0 %v111
    %134 = vmatpush.msra.mxu0 %v110
    %135 = vmatpush.msra.mxu0 %v109
    %136 = vmatmul.f32.gmra.mxu0 %v118
    %v137 = vpop.f32.mrf.mxu0
    %v138 = vadd.f32 %v115, %v137
    %139 = vdwg.mxu0
    %vm140 = vcmask 58368
    %141 = vst.msk [vmem:[#allocation5] sm:$0x3] %vm140, %v138
    // Predicated region
    $region34: #{tpu_custom_call.1} parent=1 // pred_check
      _
    $region35: #{tpu_custom_call.1} parent=1 // pred_check_branch
      %143 = sbr.rel (0) target = $region37
    $region36: #{tpu_custom_call.1} parent=1 // pred_region
      %145 = vsyncadd [#allocation4], 0
      %s147 = sshll.u32 [#allocation5], 4
      %s148 = int_to_ptr.vmem [resolvable:$true] %s147
      %s149 = sshll.u32 %s7, 4
      %s150 = int_to_ptr.hbm [resolvable:$true] %s149
      %152 = dma.vmem_to_hbm [thread:$0]  %s148, 32, %s150, [#allocation4]
    $region37: #{tpu_custom_call.1} parent=1 // pred_fallthru
      _
    // Predicated region
    $region38: #{tpu_custom_call.1} parent=1 // pred_check
      _
    $region39: #{tpu_custom_call.1} parent=1 // pred_check_branch
      %154 = sbr.rel (0) target = $region41
    $region40: #{tpu_custom_call.1} parent=1 // pred_region
      %156 = dma.done [#allocation4], 32
    $region41: #{tpu_custom_call.1} parent=1 // pred_fallthru
      _
    %157 = vsyncpa [#allocation3], 1
    %158 = vsyncpa [#allocation4], 1

</llo_original>
